<compile_context>
chip_gen: v5e
topology: v5e:2x2
jax: 0.10.0
libtpu: 0.0.40
codegen_flags: <defaults>
</compile_context>

<pallas_src>
import functools

import jax
import jax.numpy as jnp
from jax.experimental import pallas as pl
from jax.experimental.pallas import tpu as pltpu

_BIG = 1e30  # large finite sentinel (avoids inf-inf NaN on fully-padded rows)


def _round_up(a, b):
    return (a + b - 1) // b * b


def _triplet_hard_kernel(xrow_ref, xfull_ref, sqall_ref, pidc_ref, pidr_ref,
                         o_ref, *, margin, n_valid):
    """One row tile: (TM, D_pad) rows vs the full (B_pad, D_pad) batch."""
    xr = xrow_ref[...]                                     # (TM, Dp)  bf16
    xf = xfull_ref[...]                                    # (Bp, Dp)  bf16

    # MXU: x_rows @ x_full^T in bf16, f32 accumulation.
    gram = jax.lax.dot_general(
        xr, xf, (((1,), (1,)), ((), ())),
        preferred_element_type=jnp.float32)                # (TM, Bp) f32

    # Row norms of this tile (cheap VPU + lane reduce); column norms come in
    # lane-dense from the wrapper -> no in-kernel transpose.
    xr32 = xr.astype(jnp.float32)
    sq_rows = jnp.sum(xr32 * xr32, axis=1, keepdims=True)  # (TM, 1)
    d2 = sq_rows + sqall_ref[...] - 2.0 * gram             # (TM, Bp)
    dist = jnp.sqrt(jnp.maximum(d2, 1e-12))                # (TM, Bp)

    # Positive / negative masks.  Padded columns (>= n_valid) are excluded.
    col = jax.lax.broadcasted_iota(jnp.int32, dist.shape, 1)
    valid = col < n_valid                                  # static mask
    same = pidc_ref[...] == pidr_ref[...]                  # (TM,1)==(1,Bp) -> (TM,Bp)
    pos = jnp.logical_and(same, valid)
    neg = jnp.logical_and(jnp.logical_not(same), valid)

    # Hard mining: single pass over dist for each reduction (lane/XLU reduce).
    dist_ap = jnp.max(jnp.where(pos, dist, -_BIG), axis=1, keepdims=True)
    dist_an = jnp.min(jnp.where(neg, dist, _BIG), axis=1, keepdims=True)

    # Per-row hinge; rows with no valid negative contribute 0 (PyTorch would
    # raise there).  TODO(synk): decide whether to surface that case explicitly.
    o_ref[...] = jnp.maximum(dist_ap - dist_an + margin, 0.0)   # (TM, 1)


def triplet_loss_pallas(inputs, targets, margin=0.3, *, tile_m=128,
                        matmul_dtype=jnp.bfloat16):
    """Pallas implementation of TripletLoss.forward(inputs, targets)."""
    B, D = inputs.shape
    TM = int(tile_m)
    assert TM % 8 == 0, "tile_m must be a multiple of 8"
    B_pad = _round_up(max(B, TM), TM)      # TM=128 default -> lane-dense columns
    D_pad = _round_up(D, 128)              # aligned MXU contraction dim

    # Quantize once for the MXU; pad with zero rows/cols (zeros do not change
    # any real distance and padded columns are masked in-kernel).
    x = jnp.pad(inputs.astype(matmul_dtype),
                ((0, B_pad - B), (0, D_pad - D)))
    xf32 = x.astype(jnp.float32)
    sq_all = jnp.sum(xf32 * xf32, axis=1).reshape(1, B_pad)      # lane-dense

    pids = jnp.pad(targets.astype(jnp.int32), (0, B_pad - B),
                   constant_values=-1)
    # (TM,1) column tile kept as an input (only 4*TM useful bytes/step); this
    # avoids deriving it from the (1,Bp) row via an XLU transpose in-kernel.
    pid_col = pids.reshape(B_pad, 1)
    pid_row = pids.reshape(1, B_pad)

    num_tiles = pl.cdiv(B_pad, TM)
    itemsize = jnp.dtype(matmul_dtype).itemsize

    # Rough VMEM budget: double-buffered tiles + resident full x + (TM,Bp) f32
    # temporaries.  Keep an explicit limit so the tiling is honest on v7x (64 MiB).
    vmem_est = (2 * TM * D_pad * itemsize            # x row tile (dbl-buffered)
                + 2 * B_pad * D_pad * itemsize       # full x (resident)
                + 2 * 2 * 8 * B_pad * 4              # sq_all + pid_row rows
                + 2 * TM * 128 * 4                   # pid col tile (lane-padded)
                + 2 * TM * 128 * 4                   # output tile
                + 8 * TM * B_pad * 4)                # in-kernel (TM,Bp) temporaries
    vmem_limit = int(min(100 * 1024 * 1024, max(32 * 1024 * 1024, 2 * vmem_est)))

    kernel = functools.partial(_triplet_hard_kernel,
                               margin=float(margin), n_valid=B)

    per_row = pl.pallas_call(
        kernel,
        out_shape=jax.ShapeDtypeStruct((B_pad, 1), jnp.float32),
        grid=(num_tiles,),
        in_specs=[
            pl.BlockSpec((TM, D_pad), lambda i: (i, 0)),      # x row tile
            pl.BlockSpec((B_pad, D_pad), lambda i: (0, 0)),   # full x (resident)
            pl.BlockSpec((1, B_pad), lambda i: (0, 0)),       # column norms
            pl.BlockSpec((TM, 1), lambda i: (i, 0)),          # pid column tile
            pl.BlockSpec((1, B_pad), lambda i: (0, 0)),       # pid row
        ],
        out_specs=pl.BlockSpec((TM, 1), lambda i: (i, 0)),
        compiler_params=pltpu.CompilerParams(
            dimension_semantics=("parallel",),
            vmem_limit_bytes=vmem_limit),
    )(x, x, sq_all, pid_col, pid_row)

    # Tiny wrapper-side mean over the valid rows (4*B bytes of output).
    return jnp.mean(per_row[:B, 0])


class TripletLoss:
    """Mirror of the PyTorch TripletLoss module (forward only)."""

    def __init__(self, margin=0.3):
        self.margin = margin

    def __call__(self, inputs, targets, surfaces=None):
        if surfaces is not None:
            # TODO(synk): augment_surfaces is a host-side numpy greedy while-loop
            # with data-dependent control flow; no clean Pallas equivalent.
            raise NotImplementedError("surfaces-based augmentation not supported")
        return triplet_loss_pallas(inputs, targets, self.margin)


# ----------------------- pure-JAX reference (for checking) ------------------
def triplet_loss_ref(inputs, targets, margin):
    # Same bf16 input quantization as the kernel so the comparison is tight.
    x = inputs.astype(jnp.bfloat16).astype(jnp.float32)
    sq = jnp.sum(x * x, axis=1, keepdims=True)
    d2 = sq + sq.T - 2.0 * jnp.dot(x, x.T, preferred_element_type=jnp.float32)
    dist = jnp.sqrt(jnp.maximum(d2, 1e-12))
    mask = targets[:, None] == targets[None, :]
    dist_ap = jnp.max(jnp.where(mask, dist, -jnp.inf), axis=1)
    dist_an = jnp.min(jnp.where(mask, jnp.inf, dist), axis=1)
    return jnp.mean(jnp.maximum(dist_ap - dist_an + margin, 0.0))


if __name__ == "__main__":
    key = jax.random.PRNGKey(0)
    B, D = 16, 64
    inputs = jax.random.normal(key, (B, D), dtype=jnp.float32)
    targets = jnp.array([0, 0, 0, 0, 1, 1, 1, 1, 2, 2, 2, 2, 3, 3, 3, 3],
                        dtype=jnp.int32)

    loss_fn = TripletLoss(margin=0.3)
    loss = jax.block_until_ready(loss_fn(inputs, targets))

    ref = triplet_loss_ref(inputs, targets, 0.3)

    assert jnp.isfinite(loss), "loss is not finite"
    assert jnp.allclose(loss, ref, rtol=1e-3, atol=1e-3), (loss, ref)

    print("KERNEL_OK")
</pallas_src>

<mosaic_0001>
module attributes {stable_mosaic.version = 11 : i64} {
  func.func @_triplet_hard_kernel(%arg0: i32, %arg1: memref<128x128xbf16, #tpu.memory_space<vmem>>, %arg2: memref<128x128xbf16, #tpu.memory_space<vmem>>, %arg3: memref<1x128xf32, #tpu.memory_space<vmem>>, %arg4: memref<128x1xi32, #tpu.memory_space<vmem>>, %arg5: memref<1x128xi32, #tpu.memory_space<vmem>>, %arg6: memref<128x1xf32, #tpu.memory_space<vmem>>) attributes {dimension_semantics = [#tpu.dimension_semantics<parallel>], iteration_bounds = array<i64: 1>, scalar_prefetch = 0 : i64, scratch_operands = 0 : i64, tpu.core_type = #tpu.core_type<tc>, window_params = [{transform_indices = @transform_0, window_bounds = array<i64: 128, 128>}, {pipeline_mode = #tpu.pipeline_mode<synchronous>, transform_indices = @transform_1, window_bounds = array<i64: 128, 128>}, {pipeline_mode = #tpu.pipeline_mode<synchronous>, transform_indices = @transform_2, window_bounds = array<i64: 1, 128>}, {transform_indices = @transform_3, window_bounds = array<i64: 128, 1>}, {pipeline_mode = #tpu.pipeline_mode<synchronous>, transform_indices = @transform_4, window_bounds = array<i64: 1, 128>}, {transform_indices = @transform_5, window_bounds = array<i64: 128, 1>}]} {
    %c0 = arith.constant 0 : index
    %c0_0 = arith.constant 0 : index
    %0 = vector.load %arg1[%c0, %c0_0] : memref<128x128xbf16, #tpu.memory_space<vmem>>, vector<128x128xbf16>
    %c0_1 = arith.constant 0 : index
    %c0_2 = arith.constant 0 : index
    %1 = vector.load %arg2[%c0_1, %c0_2] : memref<128x128xbf16, #tpu.memory_space<vmem>>, vector<128x128xbf16>
    %cst = arith.constant dense<0.000000e+00> : vector<128x128xf32>
    %2 = tpu.matmul %0, %1, %cst {dimension_numbers = #tpu.dot_dimension_numbers<[1], [1], [0], [0], [0, 0, 1, 0], [], []>} : vector<128x128xbf16>, vector<128x128xbf16>, vector<128x128xf32> -> vector<128x128xf32>
    %3 = arith.extf %0 : vector<128x128xbf16> to vector<128x128xf32>
    %4 = arith.mulf %3, %3 : vector<128x128xf32>
    %cst_3 = arith.constant dense<0.000000e+00> : vector<128xf32>
    %5 = vector.multi_reduction <add>, %4, %cst_3 [1] : vector<128x128xf32> to vector<128xf32>
    %6 = vector.shape_cast %5 : vector<128xf32> to vector<128x1xf32>
    %c0_4 = arith.constant 0 : index
    %c0_5 = arith.constant 0 : index
    %7 = vector.load %arg3[%c0_4, %c0_5] : memref<1x128xf32, #tpu.memory_space<vmem>>, vector<1x128xf32>
    %8 = vector.broadcast %6 : vector<128x1xf32> to vector<128x128xf32>
    %9 = vector.broadcast %7 : vector<1x128xf32> to vector<128x128xf32>
    %10 = arith.addf %8, %9 : vector<128x128xf32>
    %cst_6 = arith.constant 2.000000e+00 : f32
    %11 = vector.broadcast %cst_6 : f32 to vector<128x128xf32>
    %12 = arith.mulf %11, %2 : vector<128x128xf32>
    %13 = arith.subf %10, %12 : vector<128x128xf32>
    %cst_7 = arith.constant 9.99999996E-13 : f32
    %14 = vector.broadcast %cst_7 : f32 to vector<128x128xf32>
    %15 = arith.maximumf %13, %14 : vector<128x128xf32>
    %16 = math.sqrt %15 : vector<128x128xf32>
    %17 = tpu.iota {dimensions = array<i32: 1>} : vector<128x128xi32>
    %c16_i32 = arith.constant 16 : i32
    %18 = vector.broadcast %c16_i32 : i32 to vector<128x128xi32>
    %19 = arith.cmpi slt, %17, %18 : vector<128x128xi32>
    %c0_8 = arith.constant 0 : index
    %c0_9 = arith.constant 0 : index
    %20 = vector.load %arg4[%c0_8, %c0_9] : memref<128x1xi32, #tpu.memory_space<vmem>>, vector<128x1xi32>
    %c0_10 = arith.constant 0 : index
    %c0_11 = arith.constant 0 : index
    %21 = vector.load %arg5[%c0_10, %c0_11] : memref<1x128xi32, #tpu.memory_space<vmem>>, vector<1x128xi32>
    %22 = vector.broadcast %20 : vector<128x1xi32> to vector<128x128xi32>
    %23 = vector.broadcast %21 : vector<1x128xi32> to vector<128x128xi32>
    %24 = arith.cmpi eq, %22, %23 : vector<128x128xi32>
    %25 = arith.andi %24, %19 : vector<128x128xi1>
    %cst_12 = arith.constant dense<true> : vector<128x128xi1>
    %26 = arith.xori %24, %cst_12 : vector<128x128xi1>
    %27 = arith.andi %26, %19 : vector<128x128xi1>
    %cst_13 = arith.constant -1.000000e+30 : f32
    %28 = vector.broadcast %cst_13 : f32 to vector<128x128xf32>
    %29 = arith.select %25, %16, %28 : vector<128x128xi1>, vector<128x128xf32>
    %cst_14 = arith.constant dense<0xFF800000> : vector<128xf32>
    %30 = vector.multi_reduction <maximumf>, %29, %cst_14 [1] : vector<128x128xf32> to vector<128xf32>
    %31 = vector.shape_cast %30 : vector<128xf32> to vector<128x1xf32>
    %cst_15 = arith.constant 1.000000e+30 : f32
    %32 = vector.broadcast %cst_15 : f32 to vector<128x128xf32>
    %33 = arith.select %27, %16, %32 : vector<128x128xi1>, vector<128x128xf32>
    %cst_16 = arith.constant dense<0x7F800000> : vector<128xf32>
    %34 = vector.multi_reduction <minimumf>, %33, %cst_16 [1] : vector<128x128xf32> to vector<128xf32>
    %35 = vector.shape_cast %34 : vector<128xf32> to vector<128x1xf32>
    %36 = arith.subf %31, %35 : vector<128x1xf32>
    %cst_17 = arith.constant 3.000000e-01 : f32
    %37 = vector.broadcast %cst_17 : f32 to vector<128x1xf32>
    %38 = arith.addf %36, %37 : vector<128x1xf32>
    %cst_18 = arith.constant 0.000000e+00 : f32
    %39 = vector.broadcast %cst_18 : f32 to vector<128x1xf32>
    %40 = arith.maximumf %38, %39 : vector<128x1xf32>
    %c0_19 = arith.constant 0 : index
    %c0_20 = arith.constant 0 : index
    %41 = vector.load %arg6[%c0_19, %c0_20] : memref<128x1xf32, #tpu.memory_space<vmem>>, vector<128x1xf32>
    tpu.vector_store %arg6[%c0_19, %c0_20], %40 {strides = array<i32>} : memref<128x1xf32, #tpu.memory_space<vmem>>, vector<128x1xf32>,
    return
  }
  func.func @transform_0(%arg0: i32) -> (i32, i32) {
    %c0_i32 = arith.constant 0 : i32
    %c0_i32_0 = arith.constant 0 : i32
    return %arg0, %c0_i32 : i32, i32
  }
  func.func @transform_1(%arg0: i32) -> (i32, i32) {
    %c0_i32 = arith.constant 0 : i32
    %c0_i32_0 = arith.constant 0 : i32
    %c0_i32_1 = arith.constant 0 : i32
    return %c0_i32, %c0_i32_0 : i32, i32
  }
  func.func @transform_2(%arg0: i32) -> (i32, i32) {
    %c0_i32 = arith.constant 0 : i32
    %c0_i32_0 = arith.constant 0 : i32
    %c0_i32_1 = arith.constant 0 : i32
    return %c0_i32, %c0_i32_0 : i32, i32
  }
  func.func @transform_3(%arg0: i32) -> (i32, i32) {
    %c0_i32 = arith.constant 0 : i32
    %c0_i32_0 = arith.constant 0 : i32
    return %arg0, %c0_i32 : i32, i32
  }
  func.func @transform_4(%arg0: i32) -> (i32, i32) {
    %c0_i32 = arith.constant 0 : i32
    %c0_i32_0 = arith.constant 0 : i32
    %c0_i32_1 = arith.constant 0 : i32
    return %c0_i32, %c0_i32_0 : i32, i32
  }
  func.func @transform_5(%arg0: i32) -> (i32, i32) {
    %c0_i32 = arith.constant 0 : i32
    %c0_i32_0 = arith.constant 0 : i32
    return %arg0, %c0_i32 : i32, i32
  }
}

</mosaic_0001>

<llo_original>
// kernel: tpu_custom_call.1
$region0: #{tpu_custom_call.1}
  #allocation0 [shape = 'u32[]', space=smem, size = 0x4, offset = 0x4, fixed_abs, tag = 'smem constant byte address 0x4 - core index']
  #allocation1 [shape = 'u32[72,128]{1,0:T(1,128)}', space=vmem, size = 0x9000, scoped, tag = 'internal scratch']
  %s0 = inlined_call_operand.vmem [shape: bf16[128,128], index: 0, kind: input, shape index: {}]
  %s1 = inlined_call_operand.vmem [shape: bf16[128,128], index: 1, kind: input, shape index: {}]
  %s2 = inlined_call_operand.vmem [shape: f32[1,128], index: 2, kind: input, shape index: {}]
  %s3 = inlined_call_operand.vmem [shape: s32[128,1], index: 3, kind: input, shape index: {}]
  %s4 = inlined_call_operand.vmem [shape: s32[1,128], index: 4, kind: input, shape index: {}]
  %s5 = inlined_call_operand.vmem [shape: f32[128,1], index: 5, kind: output, shape index: {}]
  %s6 = sld [smem:[#allocation0]]
  $region30: #{tpu_custom_call.1} parent=0
    _
  %s8 = ssub.s32 1, %s6
  %s9 = scalar_select 0, %s8, %s6
  // Predicated region
  $region2: #{tpu_custom_call.1} parent=0 // pred_check
    _
  $region3: #{tpu_custom_call.1} parent=0 // pred_check_branch
    %11 = sbr.rel (0) target = $region5
  $region4: #{tpu_custom_call.1} parent=0 // pred_region
    _
  $region5: #{tpu_custom_call.1} parent=0 // pred_fallthru
    _
  // Predicated region
  $region6: #{tpu_custom_call.1} parent=0 // pred_check
    _
  $region7: #{tpu_custom_call.1} parent=0 // pred_check_branch
    %13 = sbr.rel (0) target = $region9
  $region8: #{tpu_custom_call.1} parent=0 // pred_region
    _
  $region9: #{tpu_custom_call.1} parent=0 // pred_fallthru
    _
  // Predicated region
  $region10: #{tpu_custom_call.1} parent=0 // pred_check
    _
  $region11: #{tpu_custom_call.1} parent=0 // pred_check_branch
    %15 = sbr.rel (0) target = $region13
  $region12: #{tpu_custom_call.1} parent=0 // pred_region
    _
  $region13: #{tpu_custom_call.1} parent=0 // pred_fallthru
    _
  // Predicated region
  $region14: #{tpu_custom_call.1} parent=0 // pred_check
    _
  $region15: #{tpu_custom_call.1} parent=0 // pred_check_branch
    %17 = sbr.rel (0) target = $region17
  $region16: #{tpu_custom_call.1} parent=0 // pred_region
    _
  $region17: #{tpu_custom_call.1} parent=0 // pred_fallthru
    _
  // Predicated region
  $region18: #{tpu_custom_call.1} parent=0 // pred_check
    _
  $region19: #{tpu_custom_call.1} parent=0 // pred_check_branch
    %19 = sbr.rel (0) target = $region21
  $region20: #{tpu_custom_call.1} parent=0 // pred_region
    _
  $region21: #{tpu_custom_call.1} parent=0 // pred_fallthru
    _
  %v20 = vld [vmem:[%s0] sm:$0xf]
  %v21 = vld [vmem:[%s0 + $0x4] sm:$0xf]
  %v22 = vld [vmem:[%s0 + $0x8] sm:$0xf]
  %v23 = vld [vmem:[%s0 + $0xc] sm:$0xf]
  %v24 = vld [vmem:[%s0 + $0x10] sm:$0xf]
  %v25 = vld [vmem:[%s0 + $0x14] sm:$0xf]
  %v26 = vld [vmem:[%s0 + $0x18] sm:$0xf]
  %v27 = vld [vmem:[%s0 + $0x1c] sm:$0xf]
  %v28 = vld [vmem:[%s0 + $0x20] sm:$0xf]
  %v29 = vld [vmem:[%s0 + $0x24] sm:$0xf]
  %v30 = vld [vmem:[%s0 + $0x28] sm:$0xf]
  %v31 = vld [vmem:[%s0 + $0x2c] sm:$0xf]
  %v32 = vld [vmem:[%s0 + $0x30] sm:$0xf]
  %v33 = vld [vmem:[%s0 + $0x34] sm:$0xf]
  %v34 = vld [vmem:[%s0 + $0x38] sm:$0xf]
  %v35 = vld [vmem:[%s0 + $0x3c] sm:$0xf]
  %v36 = vld [vmem:[%s1] sm:$0xf]
  %v37 = vld [vmem:[%s1 + $0x4] sm:$0xf]
  %v38 = vld [vmem:[%s1 + $0x8] sm:$0xf]
  %v39 = vld [vmem:[%s1 + $0xc] sm:$0xf]
  %v40 = vld [vmem:[%s1 + $0x10] sm:$0xf]
  %v41 = vld [vmem:[%s1 + $0x14] sm:$0xf]
  %v42 = vld [vmem:[%s1 + $0x18] sm:$0xf]
  %v43 = vld [vmem:[%s1 + $0x1c] sm:$0xf]
  %v44 = vld [vmem:[%s1 + $0x20] sm:$0xf]
  %v45 = vld [vmem:[%s1 + $0x24] sm:$0xf]
  %v46 = vld [vmem:[%s1 + $0x28] sm:$0xf]
  %v47 = vld [vmem:[%s1 + $0x2c] sm:$0xf]
  %v48 = vld [vmem:[%s1 + $0x30] sm:$0xf]
  %v49 = vld [vmem:[%s1 + $0x34] sm:$0xf]
  %v50 = vld [vmem:[%s1 + $0x38] sm:$0xf]
  %v51 = vld [vmem:[%s1 + $0x3c] sm:$0xf]
  %v68 = vunpack.c.l.b16 %v20
  %v69 = vunpack.c.l.b16 %v21
  %v70 = vunpack.c.l.b16 %v22
  %v71 = vunpack.c.l.b16 %v23
  %v72 = vunpack.c.l.b16 %v24
  %v73 = vunpack.c.l.b16 %v25
  %v74 = vunpack.c.l.b16 %v26
  %v75 = vunpack.c.l.b16 %v27
  %v76 = vunpack.c.l.b16 %v28
  %v77 = vunpack.c.l.b16 %v29
  %v78 = vunpack.c.l.b16 %v30
  %v79 = vunpack.c.l.b16 %v31
  %v80 = vunpack.c.l.b16 %v32
  %v81 = vunpack.c.l.b16 %v33
  %v82 = vunpack.c.l.b16 %v34
  %v83 = vunpack.c.l.b16 %v35
  %v84 = vpack.c.b16 %v69, %v68
  %v85 = vpack.c.b16 %v71, %v70
  %v86 = vpack.c.b16 %v73, %v72
  %v87 = vpack.c.b16 %v75, %v74
  %v88 = vpack.c.b16 %v77, %v76
  %v89 = vpack.c.b16 %v79, %v78
  %v90 = vpack.c.b16 %v81, %v80
  %v91 = vpack.c.b16 %v83, %v82
  %v116 = vunpack.c.l.b16 %v36
  %v117 = vunpack.c.l.b16 %v37
  %v118 = vunpack.c.l.b16 %v38
  %v119 = vunpack.c.l.b16 %v39
  %v120 = vunpack.c.l.b16 %v40
  %v121 = vunpack.c.l.b16 %v41
  %v122 = vunpack.c.l.b16 %v42
  %v123 = vunpack.c.l.b16 %v43
  %v124 = vunpack.c.l.b16 %v44
  %v125 = vunpack.c.l.b16 %v45
  %v126 = vunpack.c.l.b16 %v46
  %v127 = vunpack.c.l.b16 %v47
  %v128 = vunpack.c.l.b16 %v48
  %v129 = vunpack.c.l.b16 %v49
  %v130 = vunpack.c.l.b16 %v50
  %v131 = vunpack.c.l.b16 %v51
  %v132 = vpack.c.b16 %v117, %v116
  %v133 = vpack.c.b16 %v119, %v118
  %v134 = vpack.c.b16 %v121, %v120
  %v135 = vpack.c.b16 %v123, %v122
  %v136 = vpack.c.b16 %v125, %v124
  %v137 = vpack.c.b16 %v127, %v126
  %v138 = vpack.c.b16 %v129, %v128
  %v139 = vpack.c.b16 %v131, %v130
  %148 = vmatpush.bf16.xpose.msra.mxu0 %v139
  %149 = vmatpush.bf16.xpose.msra.mxu0 %v138
  %150 = vmatpush.bf16.xpose.msra.mxu0 %v137
  %151 = vmatpush.bf16.xpose.msra.mxu0 %v136
  %152 = vmatpush.bf16.xpose.msra.mxu0 %v135
  %153 = vmatpush.bf16.xpose.msra.mxu0 %v134
  %154 = vmatpush.bf16.xpose.msra.mxu0 %v133
  %155 = vmatpush.bf16.xpose.msra.mxu0 %v132
  %156 = vmatmul.bf16.gmra.mxu0 %v84
  %v157 = vpop.f32.mrf.mxu0
  %v158 = vadd.f32 0.0, %v157
  %v159 = vpop.f32.mrf.mxu0
  %v160 = vadd.f32 0.0, %v159
  %161 = vmatmul.bf16.gmra.mxu0 %v85
  %v162 = vpop.f32.mrf.mxu0
  %v163 = vadd.f32 0.0, %v162
  %v164 = vpop.f32.mrf.mxu0
  %v165 = vadd.f32 0.0, %v164
  %166 = vmatmul.bf16.gmra.mxu0 %v86
  %v167 = vpop.f32.mrf.mxu0
  %v168 = vadd.f32 0.0, %v167
  %v169 = vpop.f32.mrf.mxu0
  %v170 = vadd.f32 0.0, %v169
  %171 = vmatmul.bf16.gmra.mxu0 %v87
  %v172 = vpop.f32.mrf.mxu0
  %v173 = vadd.f32 0.0, %v172
  %v174 = vpop.f32.mrf.mxu0
  %v175 = vadd.f32 0.0, %v174
  %176 = vmatmul.bf16.gmra.mxu0 %v88
  %v177 = vpop.f32.mrf.mxu0
  %v178 = vadd.f32 0.0, %v177
  %v179 = vpop.f32.mrf.mxu0
  %v180 = vadd.f32 0.0, %v179
  %181 = vmatmul.bf16.gmra.mxu0 %v89
  %v182 = vpop.f32.mrf.mxu0
  %v183 = vadd.f32 0.0, %v182
  %v184 = vpop.f32.mrf.mxu0
  %v185 = vadd.f32 0.0, %v184
  %186 = vmatmul.bf16.gmra.mxu0 %v90
  %v187 = vpop.f32.mrf.mxu0
  %v188 = vadd.f32 0.0, %v187
  %v189 = vpop.f32.mrf.mxu0
  %v190 = vadd.f32 0.0, %v189
  %191 = vmatmul.bf16.gmra.mxu0 %v91
  %v192 = vpop.f32.mrf.mxu0
  %v193 = vadd.f32 0.0, %v192
  %v194 = vpop.f32.mrf.mxu0
  %v195 = vadd.f32 0.0, %v194
  %196 = vdwg.mxu0
  %v197 = vunpack.c.l.bf16 %v20
  %v198 = vunpack.c.l.bf16 %v21
  %v199 = vunpack.c.l.bf16 %v22
  %v200 = vunpack.c.l.bf16 %v23
  %v201 = vunpack.c.l.bf16 %v24
  %v202 = vunpack.c.l.bf16 %v25
  %v203 = vunpack.c.l.bf16 %v26
  %v204 = vunpack.c.l.bf16 %v27
  %v205 = vunpack.c.l.bf16 %v28
  %v206 = vunpack.c.l.bf16 %v29
  %v207 = vunpack.c.l.bf16 %v30
  %v208 = vunpack.c.l.bf16 %v31
  %v209 = vunpack.c.l.bf16 %v32
  %v210 = vunpack.c.l.bf16 %v33
  %v211 = vunpack.c.l.bf16 %v34
  %v212 = vunpack.c.l.bf16 %v35
  %v213 = vmul.f32 %v197, %v197
  %v214 = vmul.f32 %v198, %v198
  %v215 = vmul.f32 %v199, %v199
  %v216 = vmul.f32 %v200, %v200
  %v217 = vmul.f32 %v201, %v201
  %v218 = vmul.f32 %v202, %v202
  %v219 = vmul.f32 %v203, %v203
  %v220 = vmul.f32 %v204, %v204
  %v221 = vmul.f32 %v205, %v205
  %v222 = vmul.f32 %v206, %v206
  %v223 = vmul.f32 %v207, %v207
  %v224 = vmul.f32 %v208, %v208
  %v225 = vmul.f32 %v209, %v209
  %v226 = vmul.f32 %v210, %v210
  %v227 = vmul.f32 %v211, %v211
  %v228 = vmul.f32 %v212, %v212
  %229 = vadd.xlane.f32.xlu0 %v213
  %v230 = vpop.xlane.xlu0 %229
  %231 = vadd.xlane.f32.xlu0 %v214
  %v232 = vpop.xlane.xlu0 %231
  %233 = vadd.xlane.f32.xlu0 %v215
  %v234 = vpop.xlane.xlu0 %233
  %235 = vadd.xlane.f32.xlu0 %v216
  %v236 = vpop.xlane.xlu0 %235
  %237 = vadd.xlane.f32.xlu0 %v217
  %v238 = vpop.xlane.xlu0 %237
  %239 = vadd.xlane.f32.xlu0 %v218
  %v240 = vpop.xlane.xlu0 %239
  %241 = vadd.xlane.f32.xlu0 %v219
  %v242 = vpop.xlane.xlu0 %241
  %243 = vadd.xlane.f32.xlu0 %v220
  %v244 = vpop.xlane.xlu0 %243
  %245 = vadd.xlane.f32.xlu0 %v221
  %v246 = vpop.xlane.xlu0 %245
  %247 = vadd.xlane.f32.xlu0 %v222
  %v248 = vpop.xlane.xlu0 %247
  %249 = vadd.xlane.f32.xlu0 %v223
  %v250 = vpop.xlane.xlu0 %249
  %251 = vadd.xlane.f32.xlu0 %v224
  %v252 = vpop.xlane.xlu0 %251
  %253 = vadd.xlane.f32.xlu0 %v225
  %v254 = vpop.xlane.xlu0 %253
  %255 = vadd.xlane.f32.xlu0 %v226
  %v256 = vpop.xlane.xlu0 %255
  %257 = vadd.xlane.f32.xlu0 %v227
  %v258 = vpop.xlane.xlu0 %257
  %259 = vadd.xlane.f32.xlu0 %v228
  %v260 = vpop.xlane.xlu0 %259
  %v261 = vld [vmem:[%s2] sm:$0x1]
  %v263 = vperm.slane %v261, 0
  %v265 = vadd.f32 %v230, %v263
  %v266 = vadd.f32 %v232, %v263
  %v267 = vadd.f32 %v234, %v263
  %v268 = vadd.f32 %v236, %v263
  %v269 = vadd.f32 %v238, %v263
  %v270 = vadd.f32 %v240, %v263
  %v271 = vadd.f32 %v242, %v263
  %v272 = vadd.f32 %v244, %v263
  %v273 = vadd.f32 %v246, %v263
  %v274 = vadd.f32 %v248, %v263
  %v275 = vadd.f32 %v250, %v263
  %v276 = vadd.f32 %v252, %v263
  %v277 = vadd.f32 %v254, %v263
  %v278 = vadd.f32 %v256, %v263
  %v279 = vadd.f32 %v258, %v263
  %v280 = vadd.f32 %v260, %v263
  %v281 = vmul.f32 %v158, 2.0
  %v282 = vmul.f32 %v160, 2.0
  %v283 = vmul.f32 %v163, 2.0
  %v284 = vmul.f32 %v165, 2.0
  %v285 = vmul.f32 %v168, 2.0
  %v286 = vmul.f32 %v170, 2.0
  %v287 = vmul.f32 %v173, 2.0
  %v288 = vmul.f32 %v175, 2.0
  %v289 = vmul.f32 %v178, 2.0
  %v290 = vmul.f32 %v180, 2.0
  %v291 = vmul.f32 %v183, 2.0
  %v292 = vmul.f32 %v185, 2.0
  %v293 = vmul.f32 %v188, 2.0
  %v294 = vmul.f32 %v190, 2.0
  %v295 = vmul.f32 %v193, 2.0
  %v296 = vmul.f32 %v195, 2.0
  %v297 = vsub.f32 %v265, %v281
  %v298 = vsub.f32 %v266, %v282
  %v299 = vsub.f32 %v267, %v283
  %v300 = vsub.f32 %v268, %v284
  %v301 = vsub.f32 %v269, %v285
  %v302 = vsub.f32 %v270, %v286
  %v303 = vsub.f32 %v271, %v287
  %v304 = vsub.f32 %v272, %v288
  %v305 = vsub.f32 %v273, %v289
  %v306 = vsub.f32 %v274, %v290
  %v307 = vsub.f32 %v275, %v291
  %v308 = vsub.f32 %v276, %v292
  %v309 = vsub.f32 %v277, %v293
  %v310 = vsub.f32 %v278, %v294
  %v311 = vsub.f32 %v279, %v295
  %v312 = vsub.f32 %v280, %v296
  %v313 = vmax.f32 %v297, 1e-12
  %v314 = vmax.f32 %v298, 1e-12
  %v315 = vmax.f32 %v299, 1e-12
  %v316 = vmax.f32 %v300, 1e-12
  %v317 = vmax.f32 %v301, 1e-12
  %v318 = vmax.f32 %v302, 1e-12
  %v319 = vmax.f32 %v303, 1e-12
  %v320 = vmax.f32 %v304, 1e-12
  %v321 = vmax.f32 %v305, 1e-12
  %v322 = vmax.f32 %v306, 1e-12
  %v323 = vmax.f32 %v307, 1e-12
  %v324 = vmax.f32 %v308, 1e-12
  %v325 = vmax.f32 %v309, 1e-12
  %v326 = vmax.f32 %v310, 1e-12
  %v327 = vmax.f32 %v311, 1e-12
  %v328 = vmax.f32 %v312, 1e-12
  %v329 = vrsqrt.pop %v313
  %v330 = vmul.f32 %v329, %v313
  %v331 = vmul.f32 %v330, %v329
  %v332 = vmul.f32 0.5, %v331
  %v333 = vsub.f32 1.5, %v332
  %v334 = vmul.f32 %v329, %v333
  %v335 = vmul.f32 %v313, %v334
  %vm336 = vcmp.eq.f32.partialorder %v313, inf
  %v337 = vsel %vm336, %v313, %v335
  %vm338 = vcmp.eq.f32.partialorder %v313, 0.0
  %v339 = vand.u32 %v313, 2147483648
  %v340 = vsel %vm338, %v339, %v337
  %v341 = vrsqrt.pop %v314
  %v342 = vmul.f32 %v341, %v314
  %v343 = vmul.f32 %v342, %v341
  %v344 = vmul.f32 0.5, %v343
  %v345 = vsub.f32 1.5, %v344
  %v346 = vmul.f32 %v341, %v345
  %v347 = vmul.f32 %v314, %v346
  %vm348 = vcmp.eq.f32.partialorder %v314, inf
  %v349 = vsel %vm348, %v314, %v347
  %vm350 = vcmp.eq.f32.partialorder %v314, 0.0
  %v351 = vand.u32 %v314, 2147483648
  %v352 = vsel %vm350, %v351, %v349
  %v353 = vrsqrt.pop %v315
  %v354 = vmul.f32 %v353, %v315
  %v355 = vmul.f32 %v354, %v353
  %v356 = vmul.f32 0.5, %v355
  %v357 = vsub.f32 1.5, %v356
  %v358 = vmul.f32 %v353, %v357
  %v359 = vmul.f32 %v315, %v358
  %vm360 = vcmp.eq.f32.partialorder %v315, inf
  %v361 = vsel %vm360, %v315, %v359
  %vm362 = vcmp.eq.f32.partialorder %v315, 0.0
  %v363 = vand.u32 %v315, 2147483648
  %v364 = vsel %vm362, %v363, %v361
  %v365 = vrsqrt.pop %v316
  %v366 = vmul.f32 %v365, %v316
  %v367 = vmul.f32 %v366, %v365
  %v368 = vmul.f32 0.5, %v367
  %v369 = vsub.f32 1.5, %v368
  %v370 = vmul.f32 %v365, %v369
  %v371 = vmul.f32 %v316, %v370
  %vm372 = vcmp.eq.f32.partialorder %v316, inf
  %v373 = vsel %vm372, %v316, %v371
  %vm374 = vcmp.eq.f32.partialorder %v316, 0.0
  %v375 = vand.u32 %v316, 2147483648
  %v376 = vsel %vm374, %v375, %v373
  %v377 = vrsqrt.pop %v317
  %v378 = vmul.f32 %v377, %v317
  %v379 = vmul.f32 %v378, %v377
  %v380 = vmul.f32 0.5, %v379
  %v381 = vsub.f32 1.5, %v380
  %v382 = vmul.f32 %v377, %v381
  %v383 = vmul.f32 %v317, %v382
  %vm384 = vcmp.eq.f32.partialorder %v317, inf
  %v385 = vsel %vm384, %v317, %v383
  %vm386 = vcmp.eq.f32.partialorder %v317, 0.0
  %v387 = vand.u32 %v317, 2147483648
  %v388 = vsel %vm386, %v387, %v385
  %v389 = vrsqrt.pop %v318
  %v390 = vmul.f32 %v389, %v318
  %v391 = vmul.f32 %v390, %v389
  %v392 = vmul.f32 0.5, %v391
  %v393 = vsub.f32 1.5, %v392
  %v394 = vmul.f32 %v389, %v393
  %v395 = vmul.f32 %v318, %v394
  %vm396 = vcmp.eq.f32.partialorder %v318, inf
  %v397 = vsel %vm396, %v318, %v395
  %vm398 = vcmp.eq.f32.partialorder %v318, 0.0
  %v399 = vand.u32 %v318, 2147483648
  %v400 = vsel %vm398, %v399, %v397
  %v401 = vrsqrt.pop %v319
  %v402 = vmul.f32 %v401, %v319
  %v403 = vmul.f32 %v402, %v401
  %v404 = vmul.f32 0.5, %v403
  %v405 = vsub.f32 1.5, %v404
  %v406 = vmul.f32 %v401, %v405
  %v407 = vmul.f32 %v319, %v406
  %vm408 = vcmp.eq.f32.partialorder %v319, inf
  %v409 = vsel %vm408, %v319, %v407
  %vm410 = vcmp.eq.f32.partialorder %v319, 0.0
  %v411 = vand.u32 %v319, 2147483648
  %v412 = vsel %vm410, %v411, %v409
  %v413 = vrsqrt.pop %v320
  %v414 = vmul.f32 %v413, %v320
  %v415 = vmul.f32 %v414, %v413
  %v416 = vmul.f32 0.5, %v415
  %v417 = vsub.f32 1.5, %v416
  %v418 = vmul.f32 %v413, %v417
  %v419 = vmul.f32 %v320, %v418
  %vm420 = vcmp.eq.f32.partialorder %v320, inf
  %v421 = vsel %vm420, %v320, %v419
  %vm422 = vcmp.eq.f32.partialorder %v320, 0.0
  %v423 = vand.u32 %v320, 2147483648
  %v424 = vsel %vm422, %v423, %v421
  %v425 = vrsqrt.pop %v321
  %v426 = vmul.f32 %v425, %v321
  %v427 = vmul.f32 %v426, %v425
  %v428 = vmul.f32 0.5, %v427
  %v429 = vsub.f32 1.5, %v428
  %v430 = vmul.f32 %v425, %v429
  %v431 = vmul.f32 %v321, %v430
  %vm432 = vcmp.eq.f32.partialorder %v321, inf
  %v433 = vsel %vm432, %v321, %v431
  %vm434 = vcmp.eq.f32.partialorder %v321, 0.0
  %v435 = vand.u32 %v321, 2147483648
  %v436 = vsel %vm434, %v435, %v433
  %v437 = vrsqrt.pop %v322
  %v438 = vmul.f32 %v437, %v322
  %v439 = vmul.f32 %v438, %v437
  %v440 = vmul.f32 0.5, %v439
  %v441 = vsub.f32 1.5, %v440
  %v442 = vmul.f32 %v437, %v441
  %v443 = vmul.f32 %v322, %v442
  %vm444 = vcmp.eq.f32.partialorder %v322, inf
  %v445 = vsel %vm444, %v322, %v443
  %vm446 = vcmp.eq.f32.partialorder %v322, 0.0
  %v447 = vand.u32 %v322, 2147483648
  %v448 = vsel %vm446, %v447, %v445
  %v449 = vrsqrt.pop %v323
  %v450 = vmul.f32 %v449, %v323
  %v451 = vmul.f32 %v450, %v449
  %v452 = vmul.f32 0.5, %v451
  %v453 = vsub.f32 1.5, %v452
  %v454 = vmul.f32 %v449, %v453
  %v455 = vmul.f32 %v323, %v454
  %vm456 = vcmp.eq.f32.partialorder %v323, inf
  %v457 = vsel %vm456, %v323, %v455
  %vm458 = vcmp.eq.f32.partialorder %v323, 0.0
  %v459 = vand.u32 %v323, 2147483648
  %v460 = vsel %vm458, %v459, %v457
  %v461 = vrsqrt.pop %v324
  %v462 = vmul.f32 %v461, %v324
  %v463 = vmul.f32 %v462, %v461
  %v464 = vmul.f32 0.5, %v463
  %v465 = vsub.f32 1.5, %v464
  %v466 = vmul.f32 %v461, %v465
  %v467 = vmul.f32 %v324, %v466
  %vm468 = vcmp.eq.f32.partialorder %v324, inf
  %v469 = vsel %vm468, %v324, %v467
  %vm470 = vcmp.eq.f32.partialorder %v324, 0.0
  %v471 = vand.u32 %v324, 2147483648
  %v472 = vsel %vm470, %v471, %v469
  %v473 = vrsqrt.pop %v325
  %v474 = vmul.f32 %v473, %v325
  %v475 = vmul.f32 %v474, %v473
  %v476 = vmul.f32 0.5, %v475
  %v477 = vsub.f32 1.5, %v476
  %v478 = vmul.f32 %v473, %v477
  %v479 = vmul.f32 %v325, %v478
  %vm480 = vcmp.eq.f32.partialorder %v325, inf
  %v481 = vsel %vm480, %v325, %v479
  %vm482 = vcmp.eq.f32.partialorder %v325, 0.0
  %v483 = vand.u32 %v325, 2147483648
  %v484 = vsel %vm482, %v483, %v481
  %v485 = vrsqrt.pop %v326
  %v486 = vmul.f32 %v485, %v326
  %v487 = vmul.f32 %v486, %v485
  %v488 = vmul.f32 0.5, %v487
  %v489 = vsub.f32 1.5, %v488
  %v490 = vmul.f32 %v485, %v489
  %v491 = vmul.f32 %v326, %v490
  %vm492 = vcmp.eq.f32.partialorder %v326, inf
  %v493 = vsel %vm492, %v326, %v491
  %vm494 = vcmp.eq.f32.partialorder %v326, 0.0
  %v495 = vand.u32 %v326, 2147483648
  %v496 = vsel %vm494, %v495, %v493
  %v497 = vrsqrt.pop %v327
  %v498 = vmul.f32 %v497, %v327
  %v499 = vmul.f32 %v498, %v497
  %v500 = vmul.f32 0.5, %v499
  %v501 = vsub.f32 1.5, %v500
  %v502 = vmul.f32 %v497, %v501
  %v503 = vmul.f32 %v327, %v502
  %vm504 = vcmp.eq.f32.partialorder %v327, inf
  %v505 = vsel %vm504, %v327, %v503
  %vm506 = vcmp.eq.f32.partialorder %v327, 0.0
  %v507 = vand.u32 %v327, 2147483648
  %v508 = vsel %vm506, %v507, %v505
  %v509 = vrsqrt.pop %v328
  %v510 = vmul.f32 %v509, %v328
  %v511 = vmul.f32 %v510, %v509
  %v512 = vmul.f32 0.5, %v511
  %v513 = vsub.f32 1.5, %v512
  %v514 = vmul.f32 %v509, %v513
  %v515 = vmul.f32 %v328, %v514
  %vm516 = vcmp.eq.f32.partialorder %v328, inf
  %v517 = vsel %vm516, %v328, %v515
  %vm518 = vcmp.eq.f32.partialorder %v328, 0.0
  %v519 = vand.u32 %v328, 2147483648
  %v520 = vsel %vm518, %v519, %v517
  %v521 = vlaneseq
  %v522 = vand.u32 %v521, 127
  %vm523 = vcmp.lt.s32.totalorder %v522, 16
  %v524 = vld [vmem:[%s3] sm:$0xff]
  %v525 = vld [vmem:[%s3 + $0x8] sm:$0xff]
  %v526 = vld [vmem:[%s3 + $0x10] sm:$0xff]
  %v527 = vld [vmem:[%s3 + $0x18] sm:$0xff]
  %v528 = vld [vmem:[%s3 + $0x20] sm:$0xff]
  %v529 = vld [vmem:[%s3 + $0x28] sm:$0xff]
  %v530 = vld [vmem:[%s3 + $0x30] sm:$0xff]
  %v531 = vld [vmem:[%s3 + $0x38] sm:$0xff]
  %v532 = vld [vmem:[%s3 + $0x40] sm:$0xff]
  %v533 = vld [vmem:[%s3 + $0x48] sm:$0xff]
  %v534 = vld [vmem:[%s3 + $0x50] sm:$0xff]
  %v535 = vld [vmem:[%s3 + $0x58] sm:$0xff]
  %v536 = vld [vmem:[%s3 + $0x60] sm:$0xff]
  %v537 = vld [vmem:[%s3 + $0x68] sm:$0xff]
  %v538 = vld [vmem:[%s3 + $0x70] sm:$0xff]
  %v539 = vld [vmem:[%s3 + $0x78] sm:$0xff]
  %v540 = vld [vmem:[%s4] sm:$0x1]
  %541 = vset.pattern.permute.xlu0 0
  %542 = vperm.xlu0 %541, %v524
  %v543 = vpop.permute.xlu0 %542
  %544 = vset.pattern.permute.xlu0 0
  %545 = vperm.xlu0 %544, %v525
  %v546 = vpop.permute.xlu0 %545
  %547 = vset.pattern.permute.xlu0 0
  %548 = vperm.xlu0 %547, %v526
  %v549 = vpop.permute.xlu0 %548
  %550 = vset.pattern.permute.xlu0 0
  %551 = vperm.xlu0 %550, %v527
  %v552 = vpop.permute.xlu0 %551
  %553 = vset.pattern.permute.xlu0 0
  %554 = vperm.xlu0 %553, %v528
  %v555 = vpop.permute.xlu0 %554
  %556 = vset.pattern.permute.xlu0 0
  %557 = vperm.xlu0 %556, %v529
  %v558 = vpop.permute.xlu0 %557
  %559 = vset.pattern.permute.xlu0 0
  %560 = vperm.xlu0 %559, %v530
  %v561 = vpop.permute.xlu0 %560
  %562 = vset.pattern.permute.xlu0 0
  %563 = vperm.xlu0 %562, %v531
  %v564 = vpop.permute.xlu0 %563
  %565 = vset.pattern.permute.xlu0 0
  %566 = vperm.xlu0 %565, %v532
  %v567 = vpop.permute.xlu0 %566
  %568 = vset.pattern.permute.xlu0 0
  %569 = vperm.xlu0 %568, %v533
  %v570 = vpop.permute.xlu0 %569
  %571 = vset.pattern.permute.xlu0 0
  %572 = vperm.xlu0 %571, %v534
  %v573 = vpop.permute.xlu0 %572
  %574 = vset.pattern.permute.xlu0 0
  %575 = vperm.xlu0 %574, %v535
  %v576 = vpop.permute.xlu0 %575
  %577 = vset.pattern.permute.xlu0 0
  %578 = vperm.xlu0 %577, %v536
  %v579 = vpop.permute.xlu0 %578
  %580 = vset.pattern.permute.xlu0 0
  %581 = vperm.xlu0 %580, %v537
  %v582 = vpop.permute.xlu0 %581
  %583 = vset.pattern.permute.xlu0 0
  %584 = vperm.xlu0 %583, %v538
  %v585 = vpop.permute.xlu0 %584
  %586 = vset.pattern.permute.xlu0 0
  %587 = vperm.xlu0 %586, %v539
  %v588 = vpop.permute.xlu0 %587
  %v589 = vperm.slane %v540, 0
  %vm590 = vcmp.eq.s32.totalorder %v543, %v589
  %vm591 = vcmp.eq.s32.totalorder %v546, %v589
  %vm592 = vcmp.eq.s32.totalorder %v549, %v589
  %vm593 = vcmp.eq.s32.totalorder %v552, %v589
  %vm594 = vcmp.eq.s32.totalorder %v555, %v589
  %vm595 = vcmp.eq.s32.totalorder %v558, %v589
  %vm596 = vcmp.eq.s32.totalorder %v561, %v589
  %vm597 = vcmp.eq.s32.totalorder %v564, %v589
  %vm598 = vcmp.eq.s32.totalorder %v567, %v589
  %vm599 = vcmp.eq.s32.totalorder %v570, %v589
  %vm600 = vcmp.eq.s32.totalorder %v573, %v589
  %vm601 = vcmp.eq.s32.totalorder %v576, %v589
  %vm602 = vcmp.eq.s32.totalorder %v579, %v589
  %vm603 = vcmp.eq.s32.totalorder %v582, %v589
  %vm604 = vcmp.eq.s32.totalorder %v585, %v589
  %vm605 = vcmp.eq.s32.totalorder %v588, %v589
  %vm606 = vmand %vm590, %vm523
  %vm607 = vmand %vm591, %vm523
  %vm608 = vmand %vm592, %vm523
  %vm609 = vmand %vm593, %vm523
  %vm610 = vmand %vm594, %vm523
  %vm611 = vmand %vm595, %vm523
  %vm612 = vmand %vm596, %vm523
  %vm613 = vmand %vm597, %vm523
  %vm614 = vmand %vm598, %vm523
  %vm615 = vmand %vm599, %vm523
  %vm616 = vmand %vm600, %vm523
  %vm617 = vmand %vm601, %vm523
  %vm618 = vmand %vm602, %vm523
  %vm619 = vmand %vm603, %vm523
  %vm620 = vmand %vm604, %vm523
  %vm621 = vmand %vm605, %vm523
  %vm622 = vmxor %vm590, 1
  %vm623 = vmxor %vm591, 1
  %vm624 = vmxor %vm592, 1
  %vm625 = vmxor %vm593, 1
  %vm626 = vmxor %vm594, 1
  %vm627 = vmxor %vm595, 1
  %vm628 = vmxor %vm596, 1
  %vm629 = vmxor %vm597, 1
  %vm630 = vmxor %vm598, 1
  %vm631 = vmxor %vm599, 1
  %vm632 = vmxor %vm600, 1
  %vm633 = vmxor %vm601, 1
  %vm634 = vmxor %vm602, 1
  %vm635 = vmxor %vm603, 1
  %vm636 = vmxor %vm604, 1
  %vm637 = vmxor %vm605, 1
  %vm638 = vmand %vm622, %vm523
  %vm639 = vmand %vm623, %vm523
  %vm640 = vmand %vm624, %vm523
  %vm641 = vmand %vm625, %vm523
  %vm642 = vmand %vm626, %vm523
  %vm643 = vmand %vm627, %vm523
  %vm644 = vmand %vm628, %vm523
  %vm645 = vmand %vm629, %vm523
  %vm646 = vmand %vm630, %vm523
  %vm647 = vmand %vm631, %vm523
  %vm648 = vmand %vm632, %vm523
  %vm649 = vmand %vm633, %vm523
  %vm650 = vmand %vm634, %vm523
  %vm651 = vmand %vm635, %vm523
  %vm652 = vmand %vm636, %vm523
  %vm653 = vmand %vm637, %vm523
  %v654 = vsel %vm606, %v340, -1e+30
  %v655 = vsel %vm607, %v352, -1e+30
  %v656 = vsel %vm608, %v364, -1e+30
  %v657 = vsel %vm609, %v376, -1e+30
  %v658 = vsel %vm610, %v388, -1e+30
  %v659 = vsel %vm611, %v400, -1e+30
  %v660 = vsel %vm612, %v412, -1e+30
  %v661 = vsel %vm613, %v424, -1e+30
  %v662 = vsel %vm614, %v436, -1e+30
  %v663 = vsel %vm615, %v448, -1e+30
  %v664 = vsel %vm616, %v460, -1e+30
  %v665 = vsel %vm617, %v472, -1e+30
  %v666 = vsel %vm618, %v484, -1e+30
  %v667 = vsel %vm619, %v496, -1e+30
  %v668 = vsel %vm620, %v508, -1e+30
  %v669 = vsel %vm621, %v520, -1e+30
  %670 = vmax.xlane.f32.xlu0 %v654
  %v671 = vpop.xlane.xlu0 %670
  %672 = vmax.xlane.f32.xlu0 %v655
  %v673 = vpop.xlane.xlu0 %672
  %674 = vmax.xlane.f32.xlu0 %v656
  %v675 = vpop.xlane.xlu0 %674
  %676 = vmax.xlane.f32.xlu0 %v657
  %v677 = vpop.xlane.xlu0 %676
  %678 = vmax.xlane.f32.xlu0 %v658
  %v679 = vpop.xlane.xlu0 %678
  %680 = vmax.xlane.f32.xlu0 %v659
  %v681 = vpop.xlane.xlu0 %680
  %682 = vmax.xlane.f32.xlu0 %v660
  %v683 = vpop.xlane.xlu0 %682
  %684 = vmax.xlane.f32.xlu0 %v661
  %v685 = vpop.xlane.xlu0 %684
  %686 = vmax.xlane.f32.xlu0 %v662
  %v687 = vpop.xlane.xlu0 %686
  %688 = vmax.xlane.f32.xlu0 %v663
  %v689 = vpop.xlane.xlu0 %688
  %690 = vmax.xlane.f32.xlu0 %v664
  %v691 = vpop.xlane.xlu0 %690
  %692 = vmax.xlane.f32.xlu0 %v665
  %v693 = vpop.xlane.xlu0 %692
  %694 = vmax.xlane.f32.xlu0 %v666
  %v695 = vpop.xlane.xlu0 %694
  %696 = vmax.xlane.f32.xlu0 %v667
  %v697 = vpop.xlane.xlu0 %696
  %698 = vmax.xlane.f32.xlu0 %v668
  %v699 = vpop.xlane.xlu0 %698
  %700 = vmax.xlane.f32.xlu0 %v669
  %v701 = vpop.xlane.xlu0 %700
  %v702 = vsel %vm638, %v340, 1e+30
  %v703 = vsel %vm639, %v352, 1e+30
  %v704 = vsel %vm640, %v364, 1e+30
  %v705 = vsel %vm641, %v376, 1e+30
  %v706 = vsel %vm642, %v388, 1e+30
  %v707 = vsel %vm643, %v400, 1e+30
  %v708 = vsel %vm644, %v412, 1e+30
  %v709 = vsel %vm645, %v424, 1e+30
  %v710 = vsel %vm646, %v436, 1e+30
  %v711 = vsel %vm647, %v448, 1e+30
  %v712 = vsel %vm648, %v460, 1e+30
  %v713 = vsel %vm649, %v472, 1e+30
  %v714 = vsel %vm650, %v484, 1e+30
  %v715 = vsel %vm651, %v496, 1e+30
  %v716 = vsel %vm652, %v508, 1e+30
  %v717 = vsel %vm653, %v520, 1e+30
  %718 = vmin.xlane.f32.xlu0 %v702
  %v719 = vpop.xlane.xlu0 %718
  %720 = vmin.xlane.f32.xlu0 %v703
  %v721 = vpop.xlane.xlu0 %720
  %722 = vmin.xlane.f32.xlu0 %v704
  %v723 = vpop.xlane.xlu0 %722
  %724 = vmin.xlane.f32.xlu0 %v705
  %v725 = vpop.xlane.xlu0 %724
  %726 = vmin.xlane.f32.xlu0 %v706
  %v727 = vpop.xlane.xlu0 %726
  %728 = vmin.xlane.f32.xlu0 %v707
  %v729 = vpop.xlane.xlu0 %728
  %730 = vmin.xlane.f32.xlu0 %v708
  %v731 = vpop.xlane.xlu0 %730
  %732 = vmin.xlane.f32.xlu0 %v709
  %v733 = vpop.xlane.xlu0 %732
  %734 = vmin.xlane.f32.xlu0 %v710
  %v735 = vpop.xlane.xlu0 %734
  %736 = vmin.xlane.f32.xlu0 %v711
  %v737 = vpop.xlane.xlu0 %736
  %738 = vmin.xlane.f32.xlu0 %v712
  %v739 = vpop.xlane.xlu0 %738
  %740 = vmin.xlane.f32.xlu0 %v713
  %v741 = vpop.xlane.xlu0 %740
  %742 = vmin.xlane.f32.xlu0 %v714
  %v743 = vpop.xlane.xlu0 %742
  %744 = vmin.xlane.f32.xlu0 %v715
  %v745 = vpop.xlane.xlu0 %744
  %746 = vmin.xlane.f32.xlu0 %v716
  %v747 = vpop.xlane.xlu0 %746
  %748 = vmin.xlane.f32.xlu0 %v717
  %v749 = vpop.xlane.xlu0 %748
  %v750 = vsub.f32 %v671, %v719
  %v751 = vsub.f32 %v673, %v721
  %v752 = vsub.f32 %v675, %v723
  %v753 = vsub.f32 %v677, %v725
  %v754 = vsub.f32 %v679, %v727
  %v755 = vsub.f32 %v681, %v729
  %v756 = vsub.f32 %v683, %v731
  %v757 = vsub.f32 %v685, %v733
  %v758 = vsub.f32 %v687, %v735
  %v759 = vsub.f32 %v689, %v737
  %v760 = vsub.f32 %v691, %v739
  %v761 = vsub.f32 %v693, %v741
  %v762 = vsub.f32 %v695, %v743
  %v763 = vsub.f32 %v697, %v745
  %v764 = vsub.f32 %v699, %v747
  %v765 = vsub.f32 %v701, %v749
  %v766 = vadd.f32 %v750, 0.3
  %v767 = vadd.f32 %v751, 0.3
  %v768 = vadd.f32 %v752, 0.3
  %v769 = vadd.f32 %v753, 0.3
  %v770 = vadd.f32 %v754, 0.3
  %v771 = vadd.f32 %v755, 0.3
  %v772 = vadd.f32 %v756, 0.3
  %v773 = vadd.f32 %v757, 0.3
  %v774 = vadd.f32 %v758, 0.3
  %v775 = vadd.f32 %v759, 0.3
  %v776 = vadd.f32 %v760, 0.3
  %v777 = vadd.f32 %v761, 0.3
  %v778 = vadd.f32 %v762, 0.3
  %v779 = vadd.f32 %v763, 0.3
  %v780 = vadd.f32 %v764, 0.3
  %v781 = vadd.f32 %v765, 0.3
  %v782 = vmax.f32 %v766, 0.0
  %v783 = vmax.f32 %v767, 0.0
  %v784 = vmax.f32 %v768, 0.0
  %v785 = vmax.f32 %v769, 0.0
  %v786 = vmax.f32 %v770, 0.0
  %v787 = vmax.f32 %v771, 0.0
  %v788 = vmax.f32 %v772, 0.0
  %v789 = vmax.f32 %v773, 0.0
  %v790 = vmax.f32 %v774, 0.0
  %v791 = vmax.f32 %v775, 0.0
  %v792 = vmax.f32 %v776, 0.0
  %v793 = vmax.f32 %v777, 0.0
  %v794 = vmax.f32 %v778, 0.0
  %v795 = vmax.f32 %v779, 0.0
  %v796 = vmax.f32 %v780, 0.0
  %v797 = vmax.f32 %v781, 0.0
  %vm798 = vcmask 7168
  %799 = vst.msk [vmem:[%s5] sm:$0xff] %vm798, %v782
  %800 = vst.msk [vmem:[%s5 + $0x8] sm:$0xff] %vm798, %v783
  %801 = vst.msk [vmem:[%s5 + $0x10] sm:$0xff] %vm798, %v784
  %802 = vst.msk [vmem:[%s5 + $0x18] sm:$0xff] %vm798, %v785
  %803 = vst.msk [vmem:[%s5 + $0x20] sm:$0xff] %vm798, %v786
  %804 = vst.msk [vmem:[%s5 + $0x28] sm:$0xff] %vm798, %v787
  %805 = vst.msk [vmem:[%s5 + $0x30] sm:$0xff] %vm798, %v788
  %806 = vst.msk [vmem:[%s5 + $0x38] sm:$0xff] %vm798, %v789
  %807 = vst.msk [vmem:[%s5 + $0x40] sm:$0xff] %vm798, %v790
  %808 = vst.msk [vmem:[%s5 + $0x48] sm:$0xff] %vm798, %v791
  %809 = vst.msk [vmem:[%s5 + $0x50] sm:$0xff] %vm798, %v792
  %810 = vst.msk [vmem:[%s5 + $0x58] sm:$0xff] %vm798, %v793
  %811 = vst.msk [vmem:[%s5 + $0x60] sm:$0xff] %vm798, %v794
  %812 = vst.msk [vmem:[%s5 + $0x68] sm:$0xff] %vm798, %v795
  %813 = vst.msk [vmem:[%s5 + $0x70] sm:$0xff] %vm798, %v796
  %814 = vst.msk [vmem:[%s5 + $0x78] sm:$0xff] %vm798, %v797
  // Predicated region
  $region22: #{tpu_custom_call.1} parent=0 // pred_check
    _
  $region23: #{tpu_custom_call.1} parent=0 // pred_check_branch
    %816 = sbr.rel (0) target = $region25
  $region24: #{tpu_custom_call.1} parent=0 // pred_region
    _
  $region25: #{tpu_custom_call.1} parent=0 // pred_fallthru
    _
  // Predicated region
  $region26: #{tpu_custom_call.1} parent=0 // pred_check
    _
  $region27: #{tpu_custom_call.1} parent=0 // pred_check_branch
    %818 = sbr.rel (0) target = $region29
  $region28: #{tpu_custom_call.1} parent=0 // pred_region
    _
  $region29: #{tpu_custom_call.1} parent=0 // pred_fallthru
    _

</llo_original>
